<compile_context>
chip_gen: v6e
topology: v6e:2x2x1
jax: 0.10.0
libtpu: 0.0.40
codegen_flags: <defaults>
</compile_context>

<pallas_src>
import math

import jax
import jax.numpy as jnp
from jax.experimental import pallas as pl
from jax.experimental.pallas import tpu as pltpu

_INV_SQRT2 = 1.0 / math.sqrt(2.0)


def _round_up(a, b):
    return (a + b - 1) // b * b


def _make_mlp_kernel(approximate_gelu):
    def kernel(x_ref, w1_ref, b1_ref, w2_ref, b2_ref, o_ref):
        # x tile: (tm, Cin) in native dtype; cast to bf16 so both dots take the
        # fast bf16 MXU path with f32 accumulation.  No-op if x is already bf16.
        x = x_ref[...].astype(jnp.bfloat16)

        # fc1  (MXU, bf16 in / f32 acc) + bias in f32
        h = jnp.dot(x, w1_ref[...], preferred_element_type=jnp.float32)
        h = h + b1_ref[...]                              # (1, H) broadcast

        if approximate_gelu:
            # tanh approximation -> transcendental runs on the EUP slot
            h = jax.nn.gelu(h, approximate=True)
        else:
            # exact (erf) GELU in f32 — matches torch.nn.GELU default
            h = 0.5 * h * (1.0 + jax.lax.erf(h * _INV_SQRT2))

        # dropout(p=0.0) is identity -> nothing to do

        # fc2  (MXU, bf16 in / f32 acc) + bias in f32
        y = jnp.dot(h.astype(jnp.bfloat16), w2_ref[...],
                    preferred_element_type=jnp.float32)
        y = y + b2_ref[...]                              # (1, Cout) broadcast

        o_ref[...] = y.astype(o_ref.dtype)

    return kernel


def mlp_pallas(x, w1, b1, w2, b2, *, row_tile=1024, approximate_gelu=False):
    """x: (..., Cin).  w1: (Cin, H), b1: (H,), w2: (H, Cout), b2: (Cout,)."""
    orig_shape = x.shape
    cin = orig_shape[-1]
    hidden = w1.shape[1]
    cout = w2.shape[1]

    x2d = x.reshape(-1, cin)
    m = x2d.shape[0]

    # ---- row tiling: sublane-aligned tile, ragged last block masked by Pallas
    tm = max(8, min(_round_up(row_tile, 8), _round_up(m, 8)))
    grid_m = pl.cdiv(m, tm)
    # v7x megacore: if there is plenty of work but only one grid step, split it
    # so the "parallel" axis can be sharded across both TensorCores.
    if grid_m == 1 and m >= 512:
        tm = _round_up(pl.cdiv(m, 2), 8)
        grid_m = pl.cdiv(m, tm)

    # Weights in bf16 (halves resident VMEM + HBM traffic); biases in f32.
    w1b = w1.astype(jnp.bfloat16)
    w2b = w2.astype(jnp.bfloat16)
    b1f = b1.reshape(1, hidden).astype(jnp.float32)
    b2f = b2.reshape(1, cout).astype(jnp.float32)

    # ---- VMEM budget (vreg-tiled sizes) + generation-aware cap --------------
    f32, bf16 = 4, 2
    x_bytes = jnp.dtype(x.dtype).itemsize
    lane = lambda n: _round_up(n, 128)
    vmem_need = (
        2 * tm * lane(cin) * x_bytes            # x tile, double-buffered
        + 2 * tm * lane(cout) * x_bytes         # out tile, double-buffered
        + 2 * _round_up(cin, 8) * lane(hidden) * bf16     # W1 (buffered)
        + 2 * _round_up(hidden, 8) * lane(cout) * bf16    # W2 (buffered)
        + 2 * 8 * (lane(hidden) + lane(cout)) * f32       # biases
        + tm * lane(hidden) * (f32 + bf16)      # hidden intermediate (+bf16 copy)
        + tm * lane(cout) * f32                 # y before store cast
        + tm * lane(cin) * bf16                 # x bf16 cast
    )
    try:
        vmem_cap = getattr(pltpu.get_tpu_info(), "vmem_capacity_bytes", 64 << 20)
    except Exception:  # pragma: no cover - conservative fallback
        vmem_cap = 64 << 20
    vmem_cap = max(vmem_cap - (16 << 20), vmem_cap * 3 // 4)   # headroom
    vmem_limit = int(min(max(vmem_need * 3 // 2, 4 << 20), vmem_cap))
    # TODO(synk): single-buffer the resident W1/W2/bias specs
    # (pipeline_mode=pl.Buffered(1)) and add a hidden-dim "arbitrary" grid axis
    # with an f32 accumulator once Cin*H + H*Cout bf16 approaches ~1/2 of the
    # v7x 64 MiB VMEM; unnecessary at these channel counts.

    cost = pl.CostEstimate(
        flops=2 * m * (cin * hidden + hidden * cout),
        transcendentals=m * hidden,
        bytes_accessed=(m * cin * x_bytes                      # read x
                        + (cin * hidden + hidden * cout) * bf16  # weights
                        + (hidden + cout) * f32                  # biases
                        + m * cout * x_bytes),                   # write out
    )

    out2d = pl.pallas_call(
        _make_mlp_kernel(approximate_gelu),
        out_shape=jax.ShapeDtypeStruct((m, cout), x.dtype),
        grid_spec=pltpu.PrefetchScalarGridSpec(
            num_scalar_prefetch=0,
            grid=(grid_m,),
            in_specs=[
                pl.BlockSpec((tm, cin), lambda i: (i, 0)),       # x rows (full last dim)
                pl.BlockSpec((cin, hidden), lambda i: (0, 0)),   # W1 (resident)
                pl.BlockSpec((1, hidden), lambda i: (0, 0)),     # b1
                pl.BlockSpec((hidden, cout), lambda i: (0, 0)),  # W2 (resident)
                pl.BlockSpec((1, cout), lambda i: (0, 0)),       # b2
            ],
            out_specs=pl.BlockSpec((tm, cout), lambda i: (i, 0)),
        ),
        compiler_params=pltpu.CompilerParams(
            dimension_semantics=("parallel",),
            vmem_limit_bytes=vmem_limit,
        ),
        cost_estimate=cost,
    )(x2d, w1b, b1f, w2b, b2f)

    return out2d.reshape(*orig_shape[:-1], cout)


def init_mlp_params(key, in_features, hidden_features, out_features, dtype=jnp.float32):
    """Deterministic init mimicking nn.Linear default (U(-1/sqrt(fan_in), ...))."""
    k1, k2, k3, k4 = jax.random.split(key, 4)
    lim1 = 1.0 / math.sqrt(in_features)
    lim2 = 1.0 / math.sqrt(hidden_features)
    # stored pre-transposed: (in, hidden) and (hidden, out)
    w1 = jax.random.uniform(k1, (in_features, hidden_features), dtype, -lim1, lim1)
    b1 = jax.random.uniform(k2, (hidden_features,), dtype, -lim1, lim1)
    w2 = jax.random.uniform(k3, (hidden_features, out_features), dtype, -lim2, lim2)
    b2 = jax.random.uniform(k4, (out_features,), dtype, -lim2, lim2)
    return w1, b1, w2, b2


if __name__ == "__main__":
    # small shapes consistent with the module: token MLP over the last dim
    B, N, C_IN = 2, 8, 32
    HIDDEN, C_OUT = 64, 32

    key = jax.random.PRNGKey(0)
    kx, kp = jax.random.split(key)
    x = jax.random.normal(kx, (B, N, C_IN), jnp.float32)
    w1, b1, w2, b2 = init_mlp_params(kp, C_IN, HIDDEN, C_OUT)

    out = mlp_pallas(x, w1, b1, w2, b2)
    out = jax.block_until_ready(out)

    # reference check in plain JAX (f32 math; kernel uses bf16 MXU inputs with
    # f32 accumulation, so compare with a bf16-level tolerance)
    h_ref = x @ w1 + b1
    h_ref = 0.5 * h_ref * (1.0 + jax.lax.erf(h_ref / math.sqrt(2.0)))
    y_ref = h_ref @ w2 + b2

    assert out.shape == (B, N, C_OUT)
    assert jnp.allclose(out, y_ref, atol=2e-2, rtol=2e-2), (
        float(jnp.max(jnp.abs(out - y_ref)))
    )

    print("KERNEL_OK")
</pallas_src>

<mosaic_0001>
module attributes {stable_mosaic.version = 11 : i64} {
  func.func @kernel(%arg0: i32, %arg1: memref<16x32xf32, #tpu.memory_space<vmem>>, %arg2: memref<32x64xbf16, #tpu.memory_space<vmem>>, %arg3: memref<1x64xf32, #tpu.memory_space<vmem>>, %arg4: memref<64x32xbf16, #tpu.memory_space<vmem>>, %arg5: memref<1x32xf32, #tpu.memory_space<vmem>>, %arg6: memref<16x32xf32, #tpu.memory_space<vmem>>) attributes {dimension_semantics = [#tpu.dimension_semantics<parallel>], iteration_bounds = array<i64: 1>, scalar_prefetch = 0 : i64, scratch_operands = 0 : i64, tpu.core_type = #tpu.core_type<tc>, window_params = [{transform_indices = @transform_0, window_bounds = array<i64: 16, 32>}, {pipeline_mode = #tpu.pipeline_mode<synchronous>, transform_indices = @transform_1, window_bounds = array<i64: 32, 64>}, {pipeline_mode = #tpu.pipeline_mode<synchronous>, transform_indices = @transform_2, window_bounds = array<i64: 1, 64>}, {pipeline_mode = #tpu.pipeline_mode<synchronous>, transform_indices = @transform_3, window_bounds = array<i64: 64, 32>}, {pipeline_mode = #tpu.pipeline_mode<synchronous>, transform_indices = @transform_4, window_bounds = array<i64: 1, 32>}, {transform_indices = @transform_5, window_bounds = array<i64: 16, 32>}]} {
    %c0 = arith.constant 0 : index
    %c0_0 = arith.constant 0 : index
    %0 = vector.load %arg1[%c0, %c0_0] : memref<16x32xf32, #tpu.memory_space<vmem>>, vector<16x32xf32>
    %1 = arith.truncf %0 : vector<16x32xf32> to vector<16x32xbf16>
    %c0_1 = arith.constant 0 : index
    %c0_2 = arith.constant 0 : index
    %2 = vector.load %arg2[%c0_1, %c0_2] : memref<32x64xbf16, #tpu.memory_space<vmem>>, vector<32x64xbf16>
    %cst = arith.constant dense<0.000000e+00> : vector<16x64xf32>
    %3 = tpu.matmul %1, %2, %cst {dimension_numbers = #tpu.dot_dimension_numbers<[1], [0], [0], [1], [0, 0, 1, 1], [], []>} : vector<16x32xbf16>, vector<32x64xbf16>, vector<16x64xf32> -> vector<16x64xf32>
    %c0_3 = arith.constant 0 : index
    %c0_4 = arith.constant 0 : index
    %4 = vector.load %arg3[%c0_3, %c0_4] : memref<1x64xf32, #tpu.memory_space<vmem>>, vector<1x64xf32>
    %5 = vector.broadcast %4 : vector<1x64xf32> to vector<16x64xf32>
    %6 = arith.addf %3, %5 : vector<16x64xf32>
    %cst_5 = arith.constant 5.000000e-01 : f32
    %7 = vector.broadcast %cst_5 : f32 to vector<16x64xf32>
    %8 = arith.mulf %7, %6 : vector<16x64xf32>
    %cst_6 = arith.constant 0.707106769 : f32
    %9 = vector.broadcast %cst_6 : f32 to vector<16x64xf32>
    %10 = arith.mulf %6, %9 : vector<16x64xf32>
    %11 = math.erf %10 : vector<16x64xf32>
    %cst_7 = arith.constant 1.000000e+00 : f32
    %12 = vector.broadcast %cst_7 : f32 to vector<16x64xf32>
    %13 = arith.addf %12, %11 : vector<16x64xf32>
    %14 = arith.mulf %8, %13 : vector<16x64xf32>
    %15 = arith.truncf %14 : vector<16x64xf32> to vector<16x64xbf16>
    %c0_8 = arith.constant 0 : index
    %c0_9 = arith.constant 0 : index
    %16 = vector.load %arg4[%c0_8, %c0_9] : memref<64x32xbf16, #tpu.memory_space<vmem>>, vector<64x32xbf16>
    %cst_10 = arith.constant dense<0.000000e+00> : vector<16x32xf32>
    %17 = tpu.matmul %15, %16, %cst_10 {dimension_numbers = #tpu.dot_dimension_numbers<[1], [0], [0], [1], [0, 0, 1, 1], [], []>} : vector<16x64xbf16>, vector<64x32xbf16>, vector<16x32xf32> -> vector<16x32xf32>
    %c0_11 = arith.constant 0 : index
    %c0_12 = arith.constant 0 : index
    %18 = vector.load %arg5[%c0_11, %c0_12] : memref<1x32xf32, #tpu.memory_space<vmem>>, vector<1x32xf32>
    %19 = vector.broadcast %18 : vector<1x32xf32> to vector<16x32xf32>
    %20 = arith.addf %17, %19 : vector<16x32xf32>
    %c0_13 = arith.constant 0 : index
    %c0_14 = arith.constant 0 : index
    %21 = vector.load %arg6[%c0_13, %c0_14] : memref<16x32xf32, #tpu.memory_space<vmem>>, vector<16x32xf32>
    tpu.vector_store %arg6[%c0_13, %c0_14], %20 {strides = array<i32>} : memref<16x32xf32, #tpu.memory_space<vmem>>, vector<16x32xf32>,
    return
  }
  func.func @transform_0(%arg0: i32) -> (i32, i32) {
    %c0_i32 = arith.constant 0 : i32
    %c0_i32_0 = arith.constant 0 : i32
    return %arg0, %c0_i32 : i32, i32
  }
  func.func @transform_1(%arg0: i32) -> (i32, i32) {
    %c0_i32 = arith.constant 0 : i32
    %c0_i32_0 = arith.constant 0 : i32
    %c0_i32_1 = arith.constant 0 : i32
    return %c0_i32, %c0_i32_0 : i32, i32
  }
  func.func @transform_2(%arg0: i32) -> (i32, i32) {
    %c0_i32 = arith.constant 0 : i32
    %c0_i32_0 = arith.constant 0 : i32
    %c0_i32_1 = arith.constant 0 : i32
    return %c0_i32, %c0_i32_0 : i32, i32
  }
  func.func @transform_3(%arg0: i32) -> (i32, i32) {
    %c0_i32 = arith.constant 0 : i32
    %c0_i32_0 = arith.constant 0 : i32
    %c0_i32_1 = arith.constant 0 : i32
    return %c0_i32, %c0_i32_0 : i32, i32
  }
  func.func @transform_4(%arg0: i32) -> (i32, i32) {
    %c0_i32 = arith.constant 0 : i32
    %c0_i32_0 = arith.constant 0 : i32
    %c0_i32_1 = arith.constant 0 : i32
    return %c0_i32, %c0_i32_0 : i32, i32
  }
  func.func @transform_5(%arg0: i32) -> (i32, i32) {
    %c0_i32 = arith.constant 0 : i32
    %c0_i32_0 = arith.constant 0 : i32
    return %arg0, %c0_i32 : i32, i32
  }
}

</mosaic_0001>

<llo_original>
// kernel: tpu_custom_call.1
$region0: #{tpu_custom_call.1}
  #allocation0 [shape = 'u32[]', space=smem, size = 0x4, offset = 0x4, fixed_abs, tag = 'smem constant byte address 0x4 - core index']
  #allocation1 [shape = 'u32[144,128]{1,0:T(1,128)}', space=vmem, size = 0x12000, scoped, tag = 'internal scratch']
  %s0 = inlined_call_operand.vmem [shape: f32[16,32], index: 0, kind: input, shape index: {}]
  %s1 = inlined_call_operand.vmem [shape: bf16[32,64], index: 1, kind: input, shape index: {}]
  %s2 = inlined_call_operand.vmem [shape: f32[1,64], index: 2, kind: input, shape index: {}]
  %s3 = inlined_call_operand.vmem [shape: bf16[64,32], index: 3, kind: input, shape index: {}]
  %s4 = inlined_call_operand.vmem [shape: f32[1,32], index: 4, kind: input, shape index: {}]
  %s5 = inlined_call_operand.hbm [shape: f32[16,32], index: 5, kind: output, shape index: {}]
  %s6 = sld [smem:[#allocation0]]
  $region30: #{tpu_custom_call.1} parent=0
    _
  %s8 = ssub.s32 1, %s6
  %s9 = scalar_select 0, %s8, %s6
  $region1: #{tpu_custom_call.1} parent=0
    #allocation2 [shape = 'u8[8192]{0}', space=vmem, size = 0x2000, scoped, tag = 'output window, operand 0, single buffered']
    #allocation3 [shape = 's32[1]{0}', space=sflag, size = 0x4, scoped, tag = 'scoped memory for tpu_custom_call.1']
    %10 = vsyncpa [#allocation3], 0
    // Predicated region
    $region2: #{tpu_custom_call.1} parent=1 // pred_check
      _
    $region3: #{tpu_custom_call.1} parent=1 // pred_check_branch
      %12 = sbr.rel (0) target = $region5
    $region4: #{tpu_custom_call.1} parent=1 // pred_region
      _
    $region5: #{tpu_custom_call.1} parent=1 // pred_fallthru
      _
    // Predicated region
    $region6: #{tpu_custom_call.1} parent=1 // pred_check
      _
    $region7: #{tpu_custom_call.1} parent=1 // pred_check_branch
      %14 = sbr.rel (0) target = $region9
    $region8: #{tpu_custom_call.1} parent=1 // pred_region
      _
    $region9: #{tpu_custom_call.1} parent=1 // pred_fallthru
      _
    // Predicated region
    $region10: #{tpu_custom_call.1} parent=1 // pred_check
      _
    $region11: #{tpu_custom_call.1} parent=1 // pred_check_branch
      %16 = sbr.rel (0) target = $region13
    $region12: #{tpu_custom_call.1} parent=1 // pred_region
      _
    $region13: #{tpu_custom_call.1} parent=1 // pred_fallthru
      _
    // Predicated region
    $region14: #{tpu_custom_call.1} parent=1 // pred_check
      _
    $region15: #{tpu_custom_call.1} parent=1 // pred_check_branch
      %18 = sbr.rel (0) target = $region17
    $region16: #{tpu_custom_call.1} parent=1 // pred_region
      _
    $region17: #{tpu_custom_call.1} parent=1 // pred_fallthru
      _
    // Predicated region
    $region18: #{tpu_custom_call.1} parent=1 // pred_check
      _
    $region19: #{tpu_custom_call.1} parent=1 // pred_check_branch
      %20 = sbr.rel (0) target = $region21
    $region20: #{tpu_custom_call.1} parent=1 // pred_region
      _
    $region21: #{tpu_custom_call.1} parent=1 // pred_fallthru
      _
    %v22 = vld [vmem:[%s0] sm:$0xff]
    %v23 = vld [vmem:[%s0 + $0x8] sm:$0xff]
    %v24 = vpack.c.bf16 %v23, %v22
    %v25 = vld [vmem:[%s1] sm:$0xf]
    %v26 = vld [vmem:[%s1 + $0x4] sm:$0xf]
    %v27 = vld [vmem:[%s1 + $0x8] sm:$0xf]
    %v28 = vld [vmem:[%s1 + $0xc] sm:$0xf]
    %v29 = vld [vmem:[%s2] sm:$0x1]
    %v31 = vlaneseq
    %v32 = vshrl.u32 %v31, 7
    %v33 = vsub.s32 0, %v32
    %v34 = vrot.slane %v29, %v33
    %v40 = vunpack.c.l.b16 %v25
    %v41 = vunpack.c.l.b16 %v26
    %v42 = vunpack.c.l.b16 %v27
    %v43 = vunpack.c.l.b16 %v28
    %v44 = vpack.c.b16 %v41, %v40
    %v45 = vpack.c.b16 %v43, %v42
    %vm48 = vcmask 261120
    %v50 = vsel %vm48, %v24, 0
    %52 = vmatprep.subr.bf16.mxu0 0
    %53 = vmatpush1.bf16.msra.mxu0 0
    %54 = vmatprep.subr.bf16.mxu0 0
    %55 = vmatpush1.bf16.msra.mxu0 0
    %56 = vmatprep.subr.bf16.mxu0 0
    %57 = vmatpush1.bf16.msra.mxu0 0
    %58 = vmatprep.subr.bf16.mxu0 0
    %59 = vmatpush1.bf16.msra.mxu0 0
    %60 = vmatprep.subr.bf16.mxu0 0
    %61 = vmatpush1.bf16.msra.mxu0 0
    %62 = vmatprep.subr.bf16.mxu0 0
    %63 = vmatpush1.bf16.msra.mxu0 0
    %64 = vmatprep.subr.bf16.mxu0 0
    %65 = vmatpush1.bf16.msra.mxu0 %v45
    %66 = vmatprep.subr.bf16.mxu0 0
    %67 = vmatpush1.bf16.msra.mxu0 %v44
    %68 = vmatprep.subr.bf16.mxu0 0
    %69 = vmatpush2.bf16.msra.mxu0 0
    %70 = vmatprep.subr.bf16.mxu0 0
    %71 = vmatpush2.bf16.msra.mxu0 0
    %72 = vmatprep.subr.bf16.mxu0 0
    %73 = vmatpush2.bf16.msra.mxu0 0
    %74 = vmatprep.subr.bf16.mxu0 0
    %75 = vmatpush2.bf16.msra.mxu0 0
    %76 = vmatprep.subr.bf16.mxu0 0
    %77 = vmatpush2.bf16.msra.mxu0 0
    %78 = vmatprep.subr.bf16.mxu0 0
    %79 = vmatpush2.bf16.msra.mxu0 0
    %80 = vmatprep.subr.bf16.mxu0 0
    %81 = vmatpush2.bf16.msra.mxu0 0
    %82 = vmatprep.subr.bf16.mxu0 0
    %83 = vmatpush2.bf16.msra.mxu0 0
    %84 = vmatprep.mubr.bf16.mxu0 0
    %85 = vmatmul.mubr.bf16.gmra.mxu0 %v50
    %v86 = vpop.f32.mrf.mxu0
    %v87 = vadd.f32 %v34, %v86
    %v88 = vpop.f32.mrf.mxu0
    %v89 = vpop.f32.mrf.mxu0
    %v90 = vadd.f32 %v34, %v89
    %v91 = vpop.f32.mrf.mxu0
    %92 = vdwg.mxu0
    %v93 = vmul.f32 %v87, 0.5
    %v94 = vmul.f32 %v90, 0.5
    %v95 = vmul.f32 %v87, 0.70710677
    %v96 = vmul.f32 %v90, 0.70710677
    %v97 = verf.f32.pop %v95
    %v98 = verf.f32.pop %v96
    %v99 = vadd.f32 %v97, 1.0
    %v100 = vadd.f32 %v98, 1.0
    %v101 = vmul.f32 %v93, %v99
    %v102 = vmul.f32 %v94, %v100
    %v103 = vpack.c.bf16 %v102, %v101
    %v104 = vld [vmem:[%s3] sm:$0xf]
    %v105 = vld [vmem:[%s3 + $0x4] sm:$0xf]
    %v106 = vld [vmem:[%s3 + $0x8] sm:$0xf]
    %v107 = vld [vmem:[%s3 + $0xc] sm:$0xf]
    %v108 = vld [vmem:[%s3 + $0x10] sm:$0xf]
    %v109 = vld [vmem:[%s3 + $0x14] sm:$0xf]
    %v110 = vld [vmem:[%s3 + $0x18] sm:$0xf]
    %v111 = vld [vmem:[%s3 + $0x1c] sm:$0xf]
    %v112 = vld [vmem:[%s4] sm:$0x1]
    %v114 = vlaneseq
    %v115 = vshrl.u32 %v114, 7
    %v116 = vsub.s32 0, %v115
    %v117 = vrot.slane %v112, %v116
    %v127 = vunpack.c.l.b16 %v104
    %v128 = vunpack.c.l.b16 %v105
    %v129 = vunpack.c.l.b16 %v106
    %v130 = vunpack.c.l.b16 %v107
    %v131 = vunpack.c.l.b16 %v108
    %v132 = vunpack.c.l.b16 %v109
    %v133 = vunpack.c.l.b16 %v110
    %v134 = vunpack.c.l.b16 %v111
    %v135 = vpack.c.b16 %v128, %v127
    %v136 = vpack.c.b16 %v130, %v129
    %v137 = vpack.c.b16 %v132, %v131
    %v138 = vpack.c.b16 %v134, %v133
    %vm143 = vcmask 523264
    %v145 = vsel %vm143, %v103, 0
    %147 = vmatprep.subr.bf16.mxu0 0
    %148 = vmatpush1.bf16.msra.mxu0 0
    %149 = vmatprep.subr.bf16.mxu0 0
    %150 = vmatpush1.bf16.msra.mxu0 0
    %151 = vmatprep.subr.bf16.mxu0 0
    %152 = vmatpush1.bf16.msra.mxu0 0
    %153 = vmatprep.subr.bf16.mxu0 0
    %154 = vmatpush1.bf16.msra.mxu0 0
    %155 = vmatprep.subr.bf16.mxu0 0
    %156 = vmatpush1.bf16.msra.mxu0 %v138
    %157 = vmatprep.subr.bf16.mxu0 0
    %158 = vmatpush1.bf16.msra.mxu0 %v137
    %159 = vmatprep.subr.bf16.mxu0 0
    %160 = vmatpush1.bf16.msra.mxu0 %v136
    %161 = vmatprep.subr.bf16.mxu0 0
    %162 = vmatpush1.bf16.msra.mxu0 %v135
    %163 = vmatprep.subr.bf16.mxu0 0
    %164 = vmatpush2.bf16.msra.mxu0 0
    %165 = vmatprep.subr.bf16.mxu0 0
    %166 = vmatpush2.bf16.msra.mxu0 0
    %167 = vmatprep.subr.bf16.mxu0 0
    %168 = vmatpush2.bf16.msra.mxu0 0
    %169 = vmatprep.subr.bf16.mxu0 0
    %170 = vmatpush2.bf16.msra.mxu0 0
    %171 = vmatprep.subr.bf16.mxu0 0
    %172 = vmatpush2.bf16.msra.mxu0 0
    %173 = vmatprep.subr.bf16.mxu0 0
    %174 = vmatpush2.bf16.msra.mxu0 0
    %175 = vmatprep.subr.bf16.mxu0 0
    %176 = vmatpush2.bf16.msra.mxu0 0
    %177 = vmatprep.subr.bf16.mxu0 0
    %178 = vmatpush2.bf16.msra.mxu0 0
    %179 = vmatprep.mubr.bf16.mxu0 0
    %180 = vmatmul.mubr.bf16.gmra.mxu0 %v145
    %v181 = vpop.f32.mrf.mxu0
    %v182 = vadd.f32 %v117, %v181
    %v183 = vpop.f32.mrf.mxu0
    %v184 = vpop.f32.mrf.mxu0
    %v185 = vadd.f32 %v117, %v184
    %v186 = vpop.f32.mrf.mxu0
    %187 = vdwg.mxu0
    %188 = vst.msk [vmem:[#allocation2] sm:$0xff] %vm48, %v182
    %189 = vst.msk [vmem:[#allocation2 + $0x8] sm:$0xff] %vm48, %v185
    // Predicated region
    $region22: #{tpu_custom_call.1} parent=1 // pred_check
      _
    $region23: #{tpu_custom_call.1} parent=1 // pred_check_branch
      %191 = sbr.rel (0) target = $region25
    $region24: #{tpu_custom_call.1} parent=1 // pred_region
      %s193 = ssub.s32 256, 256
      %194 = vsyncadd [#allocation3], %s193
      %s195 = sshll.u32 [#allocation2], 4
      %s196 = int_to_ptr.vmem [resolvable:$true] %s195
      %201 = dma.vmem_to_hbm [thread:$0]  %s196, 256, %s5, [#allocation3], 128, 128, 8
    $region25: #{tpu_custom_call.1} parent=1 // pred_fallthru
      _
    // Predicated region
    $region26: #{tpu_custom_call.1} parent=1 // pred_check
      _
    $region27: #{tpu_custom_call.1} parent=1 // pred_check_branch
      %203 = sbr.rel (0) target = $region29
    $region28: #{tpu_custom_call.1} parent=1 // pred_region
      %204 = dma.done [#allocation3], 256
    $region29: #{tpu_custom_call.1} parent=1 // pred_fallthru
      _
    %205 = vsyncpa [#allocation3], 1

</llo_original>
